<compile_context>
chip_gen: v6e
topology: v6e:2x2x1
jax: 0.10.0
libtpu: 0.0.40
codegen_flags: <defaults>
</compile_context>

<pallas_src>
import math
import numpy as np
import jax
import jax.numpy as jnp
from jax.experimental import pallas as pl
from jax.experimental.pallas import tpu as pltpu


# ----------------------------------------------------------------------------
# device introspection helpers
# ----------------------------------------------------------------------------
def _vmem_capacity_bytes():
    try:
        info = pltpu.get_tpu_info()
        for name in ("vmem_capacity_bytes", "vmem_size_bytes", "vmem_bytes"):
            v = getattr(info, name, None)
            if isinstance(v, (int, np.integer)) and int(v) > 0:
                return int(v)
    except Exception:
        pass
    return 64 << 20   # conservative default = v7x per-TC VMEM


def _pick_row_tile(hw, cap):
    """Largest divisor of hw <= cap, preferring bf16-friendly multiples of 16."""
    cap = max(1, min(cap, hw))
    best8 = None
    best_any = None
    for d in range(cap, 0, -1):
        if hw % d:
            continue
        if d == hw or d % 16 == 0:
            return d
        if best8 is None and d % 8 == 0:
            best8 = d
        if best_any is None:
            best_any = d
    # TODO(synk): add a padded / cdiv path for HW with no usable divisor.
    return best8 or best_any or hw


# ----------------------------------------------------------------------------
# Kernel 1: input_proj = Conv2d(kernel_size=1) + GroupNorm(32, hidden_dim)
#   pass 1: y = x @ W + b per HW tile (bf16 MXU operands, f32 accumulation),
#           y stored bf16; per-channel sum / sumsq accumulate in f32 scratch
#           and are flushed once per (batch, chunk) block.
#   pass 2: o = y * scale + shift  (scale / shift built from the group stats)
# ----------------------------------------------------------------------------
def _proj_pass1_kernel(x_ref, w_ref, b_ref, y_ref, s1_ref, s2_ref,
                       s1_acc, s2_acc):
    t = pl.program_id(2)
    nt = pl.num_programs(2)

    y = jnp.dot(x_ref[0], w_ref[...],
                preferred_element_type=jnp.float32) + b_ref[...]
    y_ref[0] = y.astype(y_ref.dtype)

    @pl.when(t == 0)
    def _():
        s1_acc[...] = jnp.zeros_like(s1_acc)
        s2_acc[...] = jnp.zeros_like(s2_acc)

    # TODO(synk): for very large channel means, switch to a shifted / Welford
    # accumulation to avoid E[y^2]-E[y]^2 cancellation.
    s1_acc[...] += jnp.sum(y, axis=0)[None, :]
    s2_acc[...] += jnp.sum(y * y, axis=0)[None, :]

    @pl.when(t == nt - 1)
    def _():
        s1_ref[0] = s1_acc[...]
        s2_ref[0] = s2_acc[...]


def _proj_pass2_kernel(y_ref, scale_ref, shift_ref, o_ref):
    o_ref[0] = y_ref[0].astype(jnp.float32) * scale_ref[0] + shift_ref[0]


def input_proj(x_nhwc, w, b, gamma, beta, num_groups=32,
               row_tile=None, num_chunks=None):
    B, Hh, Ww, Cin = x_nhwc.shape
    Hid = w.shape[1]
    HW = Hh * Ww

    vmem_cap = _vmem_capacity_bytes()
    big_vmem = vmem_cap >= (100 << 20)           # v5e / v6e (128 MiB) vs v7x (64 MiB)
    cap1 = 2048 if big_vmem else 512
    budget = int(min((vmem_cap * 3) // 4, 96 << 20))

    if row_tile is None:
        row_tile = _pick_row_tile(HW, cap1)
    assert HW % row_tile == 0
    nT_total = HW // row_tile

    # extra parallel chunk axis so both v7x TensorCores get work when B == 1
    if num_chunks is None:
        num_chunks = 1 if B >= 2 else 2
    NC = num_chunks
    if NC < 1 or nT_total % NC != 0:
        NC = 1
    nTc = nT_total // NC

    x2 = x_nhwc.reshape(B, HW, Cin).astype(jnp.bfloat16)
    w_bf = w.astype(jnp.bfloat16)

    need1 = (2 * row_tile * Cin * 2            # x tiles (bf16, double buffered)
             + 2 * row_tile * Hid * 2          # y tiles (bf16)
             + 2 * Cin * Hid * 2               # weight
             + 2 * Hid * 4                     # bias
             + 4 * 2 * Hid * 4                 # s1/s2 output blocks
             + 2 * Hid * 4                     # scratch
             + (4 << 20))
    vmem_limit1 = int(min(max(need1, 32 << 20), budget))

    y, s1, s2 = pl.pallas_call(
        _proj_pass1_kernel,
        out_shape=(jax.ShapeDtypeStruct((B, HW, Hid), jnp.bfloat16),
                   jax.ShapeDtypeStruct((B * NC, 1, Hid), jnp.float32),
                   jax.ShapeDtypeStruct((B * NC, 1, Hid), jnp.float32)),
        grid=(B, NC, nTc),
        in_specs=[
            pl.BlockSpec((1, row_tile, Cin), lambda bb, c, t: (bb, c * nTc + t, 0)),
            pl.BlockSpec((Cin, Hid), lambda bb, c, t: (0, 0)),
            pl.BlockSpec((1, Hid), lambda bb, c, t: (0, 0)),
        ],
        out_specs=(
            pl.BlockSpec((1, row_tile, Hid), lambda bb, c, t: (bb, c * nTc + t, 0)),
            pl.BlockSpec((1, 1, Hid), lambda bb, c, t: (bb * NC + c, 0, 0)),
            pl.BlockSpec((1, 1, Hid), lambda bb, c, t: (bb * NC + c, 0, 0)),
        ),
        scratch_shapes=[pltpu.VMEM((1, Hid), jnp.float32),
                        pltpu.VMEM((1, Hid), jnp.float32)],
        compiler_params=pltpu.CompilerParams(
            dimension_semantics=("parallel", "parallel", "arbitrary"),
            vmem_limit_bytes=vmem_limit1),
    )(x2, w_bf, b)

    # tiny per-channel GroupNorm statistics glue (B x Hid scalars) in plain JAX
    s1 = s1.reshape(B, NC, Hid).sum(axis=1)
    s2 = s2.reshape(B, NC, Hid).sum(axis=1)
    cpg = Hid // num_groups
    n = float(HW * cpg)
    mean_g = s1.reshape(B, num_groups, cpg).sum(-1) / n
    var_g = jnp.maximum(
        s2.reshape(B, num_groups, cpg).sum(-1) / n - mean_g * mean_g, 0.0)
    inv_c = jnp.repeat(jax.lax.rsqrt(var_g + 1e-5), cpg, axis=1)      # (B, Hid)
    mean_c = jnp.repeat(mean_g, cpg, axis=1)
    scale = inv_c * gamma                                             # gamma: (1, Hid)
    shift = beta - mean_c * scale

    # pass 2 is pure elementwise / HBM bound: give it its own (larger) row tile
    row_tile2 = _pick_row_tile(HW, cap1 * 2)
    nT2 = HW // row_tile2
    need2 = 2 * row_tile2 * Hid * (2 + 4) + 4 * Hid * 4 + (4 << 20)
    vmem_limit2 = int(min(max(need2, 32 << 20), budget))

    out = pl.pallas_call(
        _proj_pass2_kernel,
        out_shape=jax.ShapeDtypeStruct((B, HW, Hid), jnp.float32),
        grid=(B, nT2),
        in_specs=[
            pl.BlockSpec((1, row_tile2, Hid), lambda bb, t: (bb, t, 0)),
            pl.BlockSpec((1, 1, Hid), lambda bb, t: (bb, 0, 0)),
            pl.BlockSpec((1, 1, Hid), lambda bb, t: (bb, 0, 0)),
        ],
        out_specs=pl.BlockSpec((1, row_tile2, Hid), lambda bb, t: (bb, t, 0)),
        compiler_params=pltpu.CompilerParams(
            dimension_semantics=("parallel", "parallel"),
            vmem_limit_bytes=vmem_limit2),
    )(y, scale[:, None, :], shift[:, None, :])
    return out.reshape(B, Hh, Ww, Hid)


def input_proj_ref(x, w, b, gamma, beta, G=32):
    # mirrors the kernel's bf16 MXU operand policy (standard on TPU); GroupNorm
    # math stays f32.
    xq = x.astype(jnp.bfloat16).astype(jnp.float32)
    wq = w.astype(jnp.bfloat16).astype(jnp.float32)
    y = jnp.einsum('bhwc,cd->bhwd', xq, wq) + b.reshape(1, 1, 1, -1)
    B, H, W, Hid = y.shape
    yg = y.reshape(B, H * W, G, Hid // G)
    mean = yg.mean(axis=(1, 3), keepdims=True)
    var = ((yg - mean) ** 2).mean(axis=(1, 3), keepdims=True)
    yn = ((yg - mean) / jnp.sqrt(var + 1e-5)).reshape(B, H, W, Hid)
    return yn * gamma.reshape(1, 1, 1, -1) + beta.reshape(1, 1, 1, -1)


# ----------------------------------------------------------------------------
# Kernel 2: detection heads of MonoDETR.forward (all decoder layers at once)
#   bbox MLP(3) + inverse_sigmoid(ref) + sigmoid, class Linear, angle MLP(2),
#   depth MLP(2), geometric depth, separable bilinear grid_sample of the
#   weighted depth map, and the depth averaging formula.  Outputs are packed
#   into one zero-padded 128-lane slab via a single concatenated store; the
#   3d-dim passthrough never enters the kernel.
# ----------------------------------------------------------------------------
def _head_kernel(fu_ref, imgh_ref, hs_ref, ref_ref, dim_ref, wd_ref,
                 wf, bf_, bw2, bb2, bw3, bb3, dw2, db2, aw2, ab2, o_ref):
    b = pl.program_id(0)
    f_u = fu_ref[b]        # calibs[b, 0, 0]
    img_h = imgh_ref[b]    # img_sizes[b, 1]

    h = hs_ref[0]          # (Mr, H) f32, cast to bf16 at the MXU
    ref = ref_ref[0]       # (Mr, 6)
    size3d = dim_ref[0]    # (Mr, 3)
    dmap = wd_ref[0]       # (Hd, Wd)

    Mr, Hdim = h.shape
    C = wf.shape[1] - 3 * Hdim
    Hd, Wd = dmap.shape
    PAD = o_ref.shape[2]

    def lin(x, w_ref_, b_ref_):
        w = w_ref_[...]
        return jnp.dot(x.astype(w.dtype), w,
                       preferred_element_type=jnp.float32) + b_ref_[...]

    # ---- fused first layer: [bbox.l1 | depth.l1 | angle.l1 | class] ----
    y_all = lin(h, wf, bf_)
    x1 = jnp.maximum(y_all[:, 0:Hdim], 0.0)              # bbox hidden 1
    xd = jnp.maximum(y_all[:, Hdim:2 * Hdim], 0.0)        # depth hidden
    xa = jnp.maximum(y_all[:, 2 * Hdim:3 * Hdim], 0.0)    # angle hidden
    cls = y_all[:, 3 * Hdim:3 * Hdim + C]                  # class logits

    # ---- bbox_embed layers 2,3 + inverse_sigmoid(reference), eps = 1e-5 ----
    x2 = jnp.maximum(lin(x1, bw2, bb2), 0.0)
    tmp = lin(x2, bw3, bb3)
    r = jnp.clip(ref, 0.0, 1.0)
    tmp = tmp + jnp.log(jnp.maximum(r, 1e-5) / jnp.maximum(1.0 - r, 1e-5))
    coord = jax.nn.sigmoid(tmp)                            # (Mr, 6)

    # ---- angle / depth second layers ----
    angle = lin(xa, aw2, ab2)                              # (Mr, 24)
    depth_reg = lin(xd, dw2, db2)                          # (Mr, 2)

    # ---- geometric depth ----
    box_h = jnp.maximum((coord[:, 4:5] + coord[:, 5:6]) * img_h, 1.0)
    depth_geo = size3d[:, 0:1] / box_h * f_u               # (Mr, 1)

    # ---- F.grid_sample(weighted_depth[:,None], (coord[...,:2]-0.5)*2,
    #                    mode='bilinear', align_corners=True), zero padding ----
    # align_corners=True: ix = ((2c-1)+1)/2*(W-1) = c*(W-1).  Bilinear interp is
    # separable: out = sum_x (Wy @ dmap)[x] * Wx[x].  Kept in f32 (tiny matmul).
    ix = coord[:, 0:1] * (Wd - 1)
    iy = coord[:, 1:2] * (Hd - 1)
    x0 = jnp.floor(ix)
    y0 = jnp.floor(iy)
    wx1 = ix - x0
    wy1 = iy - y0
    x0i = x0.astype(jnp.int32)
    y0i = y0.astype(jnp.int32)
    iw = jax.lax.broadcasted_iota(jnp.int32, (Mr, Wd), 1)
    ih = jax.lax.broadcasted_iota(jnp.int32, (Mr, Hd), 1)
    # (iota == n) never matches when the upper corner index n == Hd/Wd is out of
    # range, reproducing grid_sample's zero padding (its weight is 0 anyway).
    wyv = ((ih == y0i).astype(jnp.float32) * (1.0 - wy1)
           + (ih == y0i + 1).astype(jnp.float32) * wy1)            # (Mr, Hd)
    wxv = ((iw == x0i).astype(jnp.float32) * (1.0 - wx1)
           + (iw == x0i + 1).astype(jnp.float32) * wx1)            # (Mr, Wd)
    rows = jnp.dot(wyv, dmap, preferred_element_type=jnp.float32)  # (Mr, Wd)
    depth_map = jnp.sum(rows * wxv, axis=1, keepdims=True)         # (Mr, 1)

    # ---- depth averaging (depth_predictor2loss=True branch) ----
    d0 = (pl.reciprocal(jax.nn.sigmoid(depth_reg[:, 0:1]) + 1e-6, approx=True)
          - 1.0 + depth_geo + depth_map) / 3.0

    # ---- single lane-dense packed store: [coord | cls | depth | angle | 0] ----
    tot = 6 + C + 2 + 24
    pieces = [coord, cls, d0, depth_reg[:, 1:2], angle]
    if PAD > tot:
        pieces.append(jnp.zeros((Mr, PAD - tot), jnp.float32))
    o_ref[0] = jnp.concatenate(pieces, axis=1)


def monodetr_head(hs, references, inter_dims, weighted_depth, f_u, img_h, p,
                  num_row_splits=None):
    L, B, Q, Hdim = hs.shape
    C = p['cw'].shape[1]
    M = L * Q
    Hd, Wd = weighted_depth.shape[1:]

    # optional parallel row split (keeps both v7x TensorCores busy when B == 1)
    if num_row_splits is None:
        num_row_splits = 1 if B >= 2 else 2
    NS = num_row_splits
    if NS < 1 or M % NS != 0 or (M // NS) % 8 != 0:
        NS = 1
    Mc = M // NS

    # fold the decoder-layer axis into the GEMM M dimension (head weights are
    # shared across layers in this configuration: with_box_refine=False)
    hs_b = jnp.transpose(hs, (1, 0, 2, 3)).reshape(B, M, Hdim)
    ref_b = jnp.transpose(references, (1, 0, 2, 3)).reshape(B, M, 6)
    dim_b = jnp.transpose(inter_dims, (1, 0, 2, 3)).reshape(B, M, 3)

    # fuse the four matmuls that share `h` as LHS into one wide GEMM; GEMM
    # weights are kept in bf16 (f32 accumulation on the MXU), biases in f32.
    bf16 = jnp.bfloat16
    w_fused = jnp.concatenate([p['bw1'], p['dw1'], p['aw1'], p['cw']],
                              axis=1).astype(bf16)
    b_fused = jnp.concatenate([p['bb1'], p['db1'], p['ab1'], p['cb']], axis=1)

    TOT = 6 + C + 2 + 24
    PAD = max(128, ((TOT + 127) // 128) * 128)   # lane-dense packed output

    weights = (w_fused, b_fused,
               p['bw2'].astype(bf16), p['bb2'],
               p['bw3'].astype(bf16), p['bb3'],
               p['dw2'].astype(bf16), p['db2'],
               p['aw2'].astype(bf16), p['ab2'])

    def _fullspec(shape):
        nd = len(shape)
        return pl.BlockSpec(shape, lambda bb, s, _nd=nd: (0,) * _nd)

    in_specs = [
        pl.BlockSpec(memory_space=pltpu.MemorySpace.SMEM),   # f_u   (B,)
        pl.BlockSpec(memory_space=pltpu.MemorySpace.SMEM),   # img_h (B,)
        pl.BlockSpec((1, Mc, Hdim), lambda bb, s: (bb, s, 0)),
        pl.BlockSpec((1, Mc, 6), lambda bb, s: (bb, s, 0)),
        pl.BlockSpec((1, Mc, 3), lambda bb, s: (bb, s, 0)),
        pl.BlockSpec((1, Hd, Wd), lambda bb, s: (bb, 0, 0)),
    ] + [_fullspec(w.shape) for w in weights]

    packed = pl.pallas_call(
        _head_kernel,
        out_shape=jax.ShapeDtypeStruct((B, M, PAD), jnp.float32),
        grid=(B, NS),
        in_specs=in_specs,
        out_specs=pl.BlockSpec((1, Mc, PAD), lambda bb, s: (bb, s, 0)),
        compiler_params=pltpu.CompilerParams(
            dimension_semantics=("parallel", "parallel")),
    )(f_u, img_h, hs_b, ref_b, dim_b, weighted_depth, *weights)

    packed = jnp.transpose(packed.reshape(B, L, Q, PAD), (1, 0, 2, 3))
    coord = packed[..., 0:6]
    cls = packed[..., 6:6 + C]
    depth = packed[..., 6 + C:8 + C]
    angle = packed[..., 8 + C:32 + C]
    # 3d dim is a pure passthrough of inter_references_dim; never enters the kernel
    return coord, cls, inter_dims, depth, angle


# Pure-JAX reference of the same head math (for correctness check only).
# Mirrors the kernel's bf16 MXU operand policy; everything else is f32.
def head_reference(hs, refs, dims, wdepth, f_u, img_h, p):
    q = lambda a: a.astype(jnp.bfloat16).astype(jnp.float32)

    def lin(x, w, b):
        return q(x) @ q(w) + b

    x = jax.nn.relu(lin(hs, p['bw1'], p['bb1']))
    x = jax.nn.relu(lin(x, p['bw2'], p['bb2']))
    tmp = lin(x, p['bw3'], p['bb3'])
    r = jnp.clip(refs, 0.0, 1.0)
    coord = jax.nn.sigmoid(
        tmp + jnp.log(jnp.maximum(r, 1e-5) / jnp.maximum(1.0 - r, 1e-5)))
    cls = lin(hs, p['cw'], p['cb'])
    xa = jax.nn.relu(lin(hs, p['aw1'], p['ab1']))
    angle = lin(xa, p['aw2'], p['ab2'])
    xd = jax.nn.relu(lin(hs, p['dw1'], p['db1']))
    dreg = lin(xd, p['dw2'], p['db2'])

    box_h = jnp.maximum((coord[..., 4] + coord[..., 5]) * img_h[None, :, None], 1.0)
    depth_geo = dims[..., 0] / box_h * f_u[None, :, None]

    L, B, Q, _ = coord.shape
    Hd, Wd = wdepth.shape[1:]
    ix = coord[..., 0] * (Wd - 1)
    iy = coord[..., 1] * (Hd - 1)
    x0 = jnp.floor(ix)
    y0 = jnp.floor(iy)
    wx1 = ix - x0
    wx0 = 1.0 - wx1
    wy1 = iy - y0
    wy0 = 1.0 - wy1

    def gather(yi, xi):
        valid = (yi >= 0) & (yi <= Hd - 1) & (xi >= 0) & (xi <= Wd - 1)
        yc = jnp.clip(yi, 0, Hd - 1).astype(jnp.int32)
        xc = jnp.clip(xi, 0, Wd - 1).astype(jnp.int32)
        bidx = jnp.arange(B)[None, :, None]
        v = wdepth[bidx, yc, xc]
        return jnp.where(valid, v, 0.0)

    dmv = (wy0 * (wx0 * gather(y0, x0) + wx1 * gather(y0, x0 + 1))
           + wy1 * (wx0 * gather(y0 + 1, x0) + wx1 * gather(y0 + 1, x0 + 1)))
    d0 = (1.0 / (jax.nn.sigmoid(dreg[..., 0]) + 1e-6) - 1.0 + depth_geo + dmv) / 3.0
    depth = jnp.stack([d0, dreg[..., 1]], axis=-1)
    return coord, cls, dims, depth, angle


if __name__ == "__main__":
    key = jax.random.PRNGKey(0)
    _keys = iter(jax.random.split(key, 64))

    def nk():
        return next(_keys)

    # small, forward-consistent sizes
    B = 2
    H0, W0, C0 = 16, 16, 8          # backbone level-0 feature (NHWC)
    H1, W1, C1 = 8, 8, 16           # backbone level-1 feature (NHWC)
    HID, Q, NCLS, L = 32, 16, 3, 3  # hidden_dim, num_queries, classes, decoder layers

    feat0 = jax.random.normal(nk(), (B, H0, W0, C0), jnp.float32)
    feat1 = jax.random.normal(nk(), (B, H1, W1, C1), jnp.float32)

    def xavier(k, shp):
        lim = math.sqrt(6.0 / (shp[0] + shp[1]))
        return jax.random.uniform(k, shp, jnp.float32, -lim, lim)

    # input_proj params: xavier conv weight (stored as (Cin, hidden)), bias 0,
    # GroupNorm affine = (1, 0) as in the module init.
    proj_params = []
    for cin in (C0, C1):
        proj_params.append(dict(
            w=xavier(nk(), (cin, HID)),
            b=jnp.zeros((1, HID), jnp.float32),
            gamma=jnp.ones((1, HID), jnp.float32),
            beta=jnp.zeros((1, HID), jnp.float32),
        ))

    # level 0: force row_tile=64 / num_chunks=2 to exercise multi-tile stat
    # accumulation and the chunked-parallel partial-stats path.
    srcs = [input_proj(feat0, **proj_params[0], row_tile=64, num_chunks=2),
            input_proj(feat1, **proj_params[1])]

    for src, feat, pp in zip(srcs, (feat0, feat1), proj_params):
        ref = input_proj_ref(feat, pp['w'], pp['b'], pp['gamma'], pp['beta'])
        np.testing.assert_allclose(np.asarray(src), np.asarray(ref),
                                   rtol=2e-2, atol=2e-2)

    # TODO(synk): backbone / depth-aware transformer / depth_predictor are external
    # submodules; their outputs (hs, references, weighted_depth, depth map logits)
    # are deterministic synthetic stand-ins with the correct shapes.
    hs = jax.random.normal(nk(), (L, B, Q, HID), jnp.float32) * 0.5
    references = jax.nn.sigmoid(jax.random.normal(nk(), (L, B, Q, 6), jnp.float32))
    inter_dims = jax.random.uniform(nk(), (L, B, Q, 3), jnp.float32, 0.5, 3.0)
    weighted_depth = jax.nn.sigmoid(srcs[1].mean(axis=-1)) * 60.0   # (B, H1, W1)
    pred_depth_map_logits = jax.random.normal(nk(), (B, 9, H1, W1), jnp.float32)

    calibs = jnp.tile(jnp.array([[[707.0, 0.0, 640.0, 0.0],
                                  [0.0, 707.0, 190.0, 0.0],
                                  [0.0, 0.0, 1.0, 0.0]]], jnp.float32), (B, 1, 1))
    img_sizes = jnp.tile(jnp.array([[384.0, 1280.0]], jnp.float32), (B, 1))

    bias_value = -math.log((1 - 0.01) / 0.01)
    p = dict(
        bw1=xavier(nk(), (HID, HID)), bb1=jax.random.normal(nk(), (1, HID)) * 0.02,
        bw2=xavier(nk(), (HID, HID)), bb2=jax.random.normal(nk(), (1, HID)) * 0.02,
        bw3=xavier(nk(), (HID, 6)),
        bb3=jnp.zeros((1, 6), jnp.float32).at[0, 2:].set(-2.0),   # bias[2:] = -2.0
        cw=xavier(nk(), (HID, NCLS)),
        cb=jnp.full((1, NCLS), bias_value, jnp.float32),          # focal-style bias
        dw1=xavier(nk(), (HID, HID)), db1=jax.random.normal(nk(), (1, HID)) * 0.02,
        dw2=xavier(nk(), (HID, 2)), db2=jax.random.normal(nk(), (1, 2)) * 0.02,
        aw1=xavier(nk(), (HID, HID)), ab1=jax.random.normal(nk(), (1, HID)) * 0.02,
        aw2=xavier(nk(), (HID, 24)), ab2=jax.random.normal(nk(), (1, 24)) * 0.02,
    )
    p = {k: v.astype(jnp.float32) for k, v in p.items()}

    f_u = calibs[:, 0, 0]        # (B,)
    img_h = img_sizes[:, 1]      # (B,)  == img_sizes[:, 1:2] in the torch code

    # num_row_splits=2 exercises the parallel M-split path (Mc = 24, mult of 8)
    coord, cls, dim3d, depth, angle = monodetr_head(
        hs, references, inter_dims, weighted_depth, f_u, img_h, p,
        num_row_splits=2)
    jax.block_until_ready((coord, cls, dim3d, depth, angle))

    rc, rcl, rdi, rde, ran = head_reference(
        hs, references, inter_dims, weighted_depth, f_u, img_h, p)
    for got, want in ((coord, rc), (cls, rcl), (dim3d, rdi),
                      (depth, rde), (angle, ran)):
        np.testing.assert_allclose(np.asarray(got), np.asarray(want),
                                   rtol=2e-2, atol=2e-2)

    out = {
        'pred_logits': cls[-1],
        'pred_boxes': coord[-1],
        'pred_3d_dim': dim3d[-1],
        'pred_depth': depth[-1],
        'pred_angle': angle[-1],
        'pred_depth_map_logits': pred_depth_map_logits,
        'aux_outputs': [
            {'pred_logits': a, 'pred_boxes': bx, 'pred_3d_dim': c,
             'pred_angle': d, 'pred_depth': e}
            for a, bx, c, d, e in zip(cls[:-1], coord[:-1], dim3d[:-1],
                                      angle[:-1], depth[:-1])
        ],
    }
    jax.block_until_ready(out)
    print("KERNEL_OK")
</pallas_src>

<mosaic_0001>
module attributes {stable_mosaic.version = 11 : i64} {
  func.func @_proj_pass1_kernel(%arg0: i32, %arg1: i32, %arg2: i32, %arg3: memref<1x64x8xbf16, #tpu.memory_space<vmem>>, %arg4: memref<8x32xbf16, #tpu.memory_space<vmem>>, %arg5: memref<1x32xf32, #tpu.memory_space<vmem>>, %arg6: memref<1x64x32xbf16, #tpu.memory_space<vmem>>, %arg7: memref<1x1x32xf32, #tpu.memory_space<vmem>>, %arg8: memref<1x1x32xf32, #tpu.memory_space<vmem>>, %arg9: memref<1x32xf32, #tpu.memory_space<vmem>>, %arg10: memref<1x32xf32, #tpu.memory_space<vmem>>) attributes {dimension_semantics = [#tpu.dimension_semantics<parallel>, #tpu.dimension_semantics<parallel>, #tpu.dimension_semantics<arbitrary>], iteration_bounds = array<i64: 2, 2, 2>, scalar_prefetch = 0 : i64, scratch_operands = 2 : i64, tpu.core_type = #tpu.core_type<tc>, window_params = [{transform_indices = @transform_0, window_bounds = array<i64: 1, 64, 8>}, {pipeline_mode = #tpu.pipeline_mode<synchronous>, transform_indices = @transform_1, window_bounds = array<i64: 8, 32>}, {pipeline_mode = #tpu.pipeline_mode<synchronous>, transform_indices = @transform_2, window_bounds = array<i64: 1, 32>}, {transform_indices = @transform_3, window_bounds = array<i64: 1, 64, 32>}, {transform_indices = @transform_4, window_bounds = array<i64: 1, 1, 32>}, {transform_indices = @transform_5, window_bounds = array<i64: 1, 1, 32>}]} {
    %c0 = arith.constant 0 : index
    %c0_0 = arith.constant 0 : index
    %c0_1 = arith.constant 0 : index
    %0 = vector.load %arg3[%c0, %c0_0, %c0_1] : memref<1x64x8xbf16, #tpu.memory_space<vmem>>, vector<1x64x8xbf16>
    %1 = vector.shape_cast %0 : vector<1x64x8xbf16> to vector<64x8xbf16>
    %c0_2 = arith.constant 0 : index
    %c0_3 = arith.constant 0 : index
    %2 = vector.load %arg4[%c0_2, %c0_3] : memref<8x32xbf16, #tpu.memory_space<vmem>>, vector<8x32xbf16>
    %cst = arith.constant dense<0.000000e+00> : vector<64x32xf32>
    %3 = tpu.matmul %1, %2, %cst {dimension_numbers = #tpu.dot_dimension_numbers<[1], [0], [0], [1], [0, 0, 1, 1], [], []>} : vector<64x8xbf16>, vector<8x32xbf16>, vector<64x32xf32> -> vector<64x32xf32>
    %c0_4 = arith.constant 0 : index
    %c0_5 = arith.constant 0 : index
    %4 = vector.load %arg5[%c0_4, %c0_5] : memref<1x32xf32, #tpu.memory_space<vmem>>, vector<1x32xf32>
    %5 = vector.broadcast %4 : vector<1x32xf32> to vector<64x32xf32>
    %6 = arith.addf %3, %5 : vector<64x32xf32>
    %7 = arith.truncf %6 : vector<64x32xf32> to vector<64x32xbf16>
    %c0_6 = arith.constant 0 : index
    %c0_7 = arith.constant 0 : index
    %c0_8 = arith.constant 0 : index
    %8 = vector.load %arg6[%c0_6, %c0_7, %c0_8] : memref<1x64x32xbf16, #tpu.memory_space<vmem>>, vector<1x64x32xbf16>
    %9 = vector.shape_cast %8 : vector<1x64x32xbf16> to vector<64x32xbf16>
    %10 = vector.shape_cast %7 : vector<64x32xbf16> to vector<1x64x32xbf16>
    tpu.vector_store %arg6[%c0_6, %c0_7, %c0_8], %10 {strides = array<i32>} : memref<1x64x32xbf16, #tpu.memory_space<vmem>>, vector<1x64x32xbf16>,
    %c0_i32 = arith.constant 0 : i32
    %11 = arith.cmpi eq, %arg2, %c0_i32 : i32
    %12 = arith.extui %11 : i1 to i32
    %c0_i32_9 = arith.constant 0 : i32
    %13 = arith.cmpi ne, %12, %c0_i32_9 : i32
    scf.if %13 {
      %cst_21 = arith.constant 0.000000e+00 : f32
      %28 = vector.broadcast %cst_21 : f32 to vector<1x32xf32>
      %c0_22 = arith.constant 0 : index
      %c0_23 = arith.constant 0 : index
      %29 = vector.load %arg9[%c0_22, %c0_23] : memref<1x32xf32, #tpu.memory_space<vmem>>, vector<1x32xf32>
      tpu.vector_store %arg9[%c0_22, %c0_23], %28 {strides = array<i32>} : memref<1x32xf32, #tpu.memory_space<vmem>>, vector<1x32xf32>,
      %cst_24 = arith.constant 0.000000e+00 : f32
      %30 = vector.broadcast %cst_24 : f32 to vector<1x32xf32>
      %c0_25 = arith.constant 0 : index
      %c0_26 = arith.constant 0 : index
      %31 = vector.load %arg10[%c0_25, %c0_26] : memref<1x32xf32, #tpu.memory_space<vmem>>, vector<1x32xf32>
      tpu.vector_store %arg10[%c0_25, %c0_26], %30 {strides = array<i32>} : memref<1x32xf32, #tpu.memory_space<vmem>>, vector<1x32xf32>,
    } else {
    }
    %c0_10 = arith.constant 0 : index
    %c0_11 = arith.constant 0 : index
    %14 = vector.load %arg9[%c0_10, %c0_11] : memref<1x32xf32, #tpu.memory_space<vmem>>, vector<1x32xf32>
    %cst_12 = arith.constant dense<0.000000e+00> : vector<32xf32>
    %15 = vector.multi_reduction <add>, %6, %cst_12 [0] : vector<64x32xf32> to vector<32xf32>
    %16 = vector.shape_cast %15 : vector<32xf32> to vector<1x32xf32>
    %17 = arith.addf %14, %16 : vector<1x32xf32>
    %c0_13 = arith.constant 0 : index
    %c0_14 = arith.constant 0 : index
    %18 = vector.load %arg9[%c0_13, %c0_14] : memref<1x32xf32, #tpu.memory_space<vmem>>, vector<1x32xf32>
    tpu.vector_store %arg9[%c0_13, %c0_14], %17 {strides = array<i32>} : memref<1x32xf32, #tpu.memory_space<vmem>>, vector<1x32xf32>,
    %c0_15 = arith.constant 0 : index
    %c0_16 = arith.constant 0 : index
    %19 = vector.load %arg10[%c0_15, %c0_16] : memref<1x32xf32, #tpu.memory_space<vmem>>, vector<1x32xf32>
    %20 = arith.mulf %6, %6 : vector<64x32xf32>
    %cst_17 = arith.constant dense<0.000000e+00> : vector<32xf32>
    %21 = vector.multi_reduction <add>, %20, %cst_17 [0] : vector<64x32xf32> to vector<32xf32>
    %22 = vector.shape_cast %21 : vector<32xf32> to vector<1x32xf32>
    %23 = arith.addf %19, %22 : vector<1x32xf32>
    %c0_18 = arith.constant 0 : index
    %c0_19 = arith.constant 0 : index
    %24 = vector.load %arg10[%c0_18, %c0_19] : memref<1x32xf32, #tpu.memory_space<vmem>>, vector<1x32xf32>
    tpu.vector_store %arg10[%c0_18, %c0_19], %23 {strides = array<i32>} : memref<1x32xf32, #tpu.memory_space<vmem>>, vector<1x32xf32>,
    %c1_i32 = arith.constant 1 : i32
    %25 = arith.cmpi eq, %arg2, %c1_i32 : i32
    %26 = arith.extui %25 : i1 to i32
    %c0_i32_20 = arith.constant 0 : i32
    %27 = arith.cmpi ne, %26, %c0_i32_20 : i32
    scf.if %27 {
      %c0_21 = arith.constant 0 : index
      %c0_22 = arith.constant 0 : index
      %28 = vector.load %arg9[%c0_21, %c0_22] : memref<1x32xf32, #tpu.memory_space<vmem>>, vector<1x32xf32>
      %c0_23 = arith.constant 0 : index
      %c0_24 = arith.constant 0 : index
      %c0_25 = arith.constant 0 : index
      %29 = vector.load %arg7[%c0_23, %c0_24, %c0_25] : memref<1x1x32xf32, #tpu.memory_space<vmem>>, vector<1x1x32xf32>
      %30 = vector.shape_cast %29 : vector<1x1x32xf32> to vector<1x32xf32>
      %31 = vector.shape_cast %28 : vector<1x32xf32> to vector<1x1x32xf32>
      tpu.vector_store %arg7[%c0_23, %c0_24, %c0_25], %31 {strides = array<i32>} : memref<1x1x32xf32, #tpu.memory_space<vmem>>, vector<1x1x32xf32>,
      %c0_26 = arith.constant 0 : index
      %c0_27 = arith.constant 0 : index
      %32 = vector.load %arg10[%c0_26, %c0_27] : memref<1x32xf32, #tpu.memory_space<vmem>>, vector<1x32xf32>
      %c0_28 = arith.constant 0 : index
      %c0_29 = arith.constant 0 : index
      %c0_30 = arith.constant 0 : index
      %33 = vector.load %arg8[%c0_28, %c0_29, %c0_30] : memref<1x1x32xf32, #tpu.memory_space<vmem>>, vector<1x1x32xf32>
      %34 = vector.shape_cast %33 : vector<1x1x32xf32> to vector<1x32xf32>
      %35 = vector.shape_cast %32 : vector<1x32xf32> to vector<1x1x32xf32>
      tpu.vector_store %arg8[%c0_28, %c0_29, %c0_30], %35 {strides = array<i32>} : memref<1x1x32xf32, #tpu.memory_space<vmem>>, vector<1x1x32xf32>,
    } else {
    }
    return
  }
  func.func @transform_0(%arg0: i32, %arg1: i32, %arg2: i32) -> (i32, i32, i32) {
    %c2_i32 = arith.constant 2 : i32
    %0 = arith.muli %arg1, %c2_i32 : i32
    %1 = arith.addi %0, %arg2 : i32
    %c0_i32 = arith.constant 0 : i32
    %c0_i32_0 = arith.constant 0 : i32
    return %arg0, %1, %c0_i32 : i32, i32, i32
  }
  func.func @transform_1(%arg0: i32, %arg1: i32, %arg2: i32) -> (i32, i32) {
    %c0_i32 = arith.constant 0 : i32
    %c0_i32_0 = arith.constant 0 : i32
    %c0_i32_1 = arith.constant 0 : i32
    return %c0_i32, %c0_i32_0 : i32, i32
  }
  func.func @transform_2(%arg0: i32, %arg1: i32, %arg2: i32) -> (i32, i32) {
    %c0_i32 = arith.constant 0 : i32
    %c0_i32_0 = arith.constant 0 : i32
    %c0_i32_1 = arith.constant 0 : i32
    return %c0_i32, %c0_i32_0 : i32, i32
  }
  func.func @transform_3(%arg0: i32, %arg1: i32, %arg2: i32) -> (i32, i32, i32) {
    %c2_i32 = arith.constant 2 : i32
    %0 = arith.muli %arg1, %c2_i32 : i32
    %1 = arith.addi %0, %arg2 : i32
    %c0_i32 = arith.constant 0 : i32
    %c0_i32_0 = arith.constant 0 : i32
    return %arg0, %1, %c0_i32 : i32, i32, i32
  }
  func.func @transform_4(%arg0: i32, %arg1: i32, %arg2: i32) -> (i32, i32, i32) {
    %c2_i32 = arith.constant 2 : i32
    %0 = arith.muli %arg0, %c2_i32 : i32
    %1 = arith.addi %0, %arg1 : i32
    %c0_i32 = arith.constant 0 : i32
    %c0_i32_0 = arith.constant 0 : i32
    %c0_i32_1 = arith.constant 0 : i32
    return %1, %c0_i32, %c0_i32_0 : i32, i32, i32
  }
  func.func @transform_5(%arg0: i32, %arg1: i32, %arg2: i32) -> (i32, i32, i32) {
    %c2_i32 = arith.constant 2 : i32
    %0 = arith.muli %arg0, %c2_i32 : i32
    %1 = arith.addi %0, %arg1 : i32
    %c0_i32 = arith.constant 0 : i32
    %c0_i32_0 = arith.constant 0 : i32
    %c0_i32_1 = arith.constant 0 : i32
    return %1, %c0_i32, %c0_i32_0 : i32, i32, i32
  }
}

</mosaic_0001>

<llo_original>
// kernel: tpu_custom_call.1
$region0: #{tpu_custom_call.1}
  #allocation0 [shape = 'u32[]', space=smem, size = 0x4, offset = 0x4, fixed_abs, tag = 'smem constant byte address 0x4 - core index']
  #allocation1 [shape = 'u32[144,128]{1,0:T(1,128)}', space=vmem, size = 0x12000, scoped, tag = 'internal scratch']
  #allocation2 [shape = 'f32[1,32]{1,0:T(1,128)}', space=vmem, size = 0x200, scoped, tag = 'scratch operand']
  #allocation3 [shape = 'f32[1,32]{1,0:T(1,128)}', space=vmem, size = 0x200, scoped, tag = 'scratch operand']
  %s0 = inlined_call_operand.vmem [shape: bf16[2,256,8], index: 0, kind: input, shape index: {}]
  %s1 = inlined_call_operand.vmem [shape: bf16[8,32], index: 1, kind: input, shape index: {}]
  %s2 = inlined_call_operand.vmem [shape: f32[1,32], index: 2, kind: input, shape index: {}]
  %s3 = inlined_call_operand.vmem [shape: bf16[2,256,32], index: 3, kind: output, shape index: {0}]
  %s4 = inlined_call_operand.hbm [shape: f32[4,1,32], index: 4, kind: output, shape index: {1}]
  %s5 = inlined_call_operand.hbm [shape: f32[4,1,32], index: 5, kind: output, shape index: {2}]
  %6 = xla_tuple %s3, %s4, %s5
  %s7 = sld [smem:[#allocation0]]
  $region69: #{tpu_custom_call.1} parent=0
    _
  %s9 = ssub.s32 1, %s7
  %s10 = scalar_select 0, %s9, %s7
  $region1: #{tpu_custom_call.1} parent=0
    #allocation4 [shape = 'u8[1024]{0}', space=vmem, size = 0x400, scoped, tag = 'output window, operand 1']
    #allocation5 [shape = 's32[2]{0}', space=sflag, size = 0x8, scoped, tag = 'scoped memory for tpu_custom_call.1']
    #allocation6 [shape = 'u8[1024]{0}', space=vmem, size = 0x400, scoped, tag = 'output window, operand 2']
    #allocation7 [shape = 's32[2]{0}', space=sflag, size = 0x8, scoped, tag = 'scoped memory for tpu_custom_call.1']
    %11 = vsyncpa [#allocation5], 0
    %s12 = scalar_lea.sflag [#allocation5], 1
    %13 = vsyncpa %s12, 0
    %14 = vsyncpa [#allocation7], 0
    %s15 = scalar_lea.sflag [#allocation7], 1
    %16 = vsyncpa %s15, 0
    loop: start=0, step=1, limit=10
    $region2: #{tpu_custom_call.1} parent=1 // loop_pre_header
      _
    $region3: #{tpu_custom_call.1} parent=1 // loop_header
      %s18 = sphi 0, %s22
      %p19 = scmp.ge.s32.totalorder %s18, 10
      %s25 = sphi 0, %s44
      %s26 = sphi 0, %s40
      %s27 = sphi 0, %s36
      %s28 = sphi 0, %s25
      %s29 = sphi 0, %s26
      %s30 = sphi 0, %s27
      %s31 = sphi 0, %s28
      %s32 = sphi 0, %s29
      %s33 = sphi 0, %s30
      %s53 = sphi 0, %s55
      %s56 = sphi 0, %s53
      %s57 = sphi 0, %s56
      %s73 = sphi 0, %s57
      %s77 = sphi 0, %s77
      %s79 = sphi 0, %s77
      %s80 = sphi 0, %s79
      %s94 = sphi 0, %s80
      %s98 = sphi 0, %s98
      %s100 = sphi 0, %s98
      %s101 = sphi 0, %s100
      %s115 = sphi 0, %s101
      %s127 = sphi 0, %s129
      %s130 = sphi 0, %s127
      %s131 = sphi 0, %s130
      %s147 = sphi 0, %s131
      %s157 = sphi 0, %s159
      %s160 = sphi 0, %s157
      %s161 = sphi 0, %s160
      %s177 = sphi 0, %s161
      %s187 = sphi 0, %s189
      %s190 = sphi 0, %s187
      %s191 = sphi 0, %s190
      %s207 = sphi 0, %s191
    $region4: #{tpu_custom_call.1} parent=1 // loop_header_branch
      %21 = sbr.rel (%p19) target = $region8
    $region5: #{tpu_custom_call.1} parent=1 // loop_body
      %s23 = ssub.s32 %s18, 1
      %s24 = ssub.s32 %s18, 2
      %s34 = sadd.s32 1, %s27
      %p35 = scmp.ge.s32.totalorder %s34, 2
      %s36 = scalar_select %p35, 0, %s34
      %s37 = sadd.s32 1, %s26
      %s38 = scalar_select %p35, %s37, %s26
      %p39 = scmp.ge.s32.totalorder %s38, 2
      %s40 = scalar_select %p39, 0, %s38
      %s41 = sadd.s32 1, %s25
      %s42 = scalar_select %p39, %s41, %s25
      %p43 = scmp.ge.s32.totalorder %s42, 2
      %s44 = scalar_select %p43, 0, %s42
      %s45 = smul.u32 %s26, 2
      %s46 = sadd.s32 %s45, %s27
      %s47 = smul.u32 %s40, 2
      %s48 = sadd.s32 %s47, %s36
      %s49 = ssub.s32 %s25, %s44
      %s50 = ssub.s32 %s46, %s48
      %s51 = sor.u32 %s49, %s50
      %p52 = scmp.eq.s32.totalorder %s51, 0
      %s54 = sadd.s32 %s53, 1
      %s55 = scalar_select %p52, %s53, %s54
      %p58 = pneg %p52
      %p59 = scmp.eq.s32.totalorder %s18, 7
      %p60 = por %p58, %p59
      %p61 = scmp.ne.s32.totalorder %s53, %s56
      %p62 = scmp.eq.s32.totalorder %s18, 0
      %p63 = por %p61, %p62
      %p64 = scmp.ne.s32.totalorder %s53, %s56
      %p65 = scmp.eq.s32.totalorder %s23, 7
      %p66 = por %p64, %p65
      %p67 = scmp.ne.s32.totalorder %s56, %s57
      %p68 = scmp.eq.s32.totalorder %s23, 0
      %p69 = por %p67, %p68
      %p70 = scmp.ne.s32.totalorder %s56, %s57
      %p71 = scmp.eq.s32.totalorder %s24, 7
      %p72 = por %p70, %p71
      %p74 = scmp.ne.s32.totalorder %s57, %s73
      %p75 = scmp.eq.s32.totalorder %s24, 0
      %p76 = por %p74, %p75
      %s78 = sadd.s32 %s77, 1
      %p81 = scmp.eq.s32.totalorder %s18, 7
      %p82 = scmp.ne.s32.totalorder %s77, %s79
      %p83 = scmp.eq.s32.totalorder %s18, 0
      %p84 = por %p82, %p83
      %p85 = scmp.ne.s32.totalorder %s77, %s79
      %p86 = scmp.eq.s32.totalorder %s23, 7
      %p87 = por %p85, %p86
      %p88 = scmp.ne.s32.totalorder %s79, %s80
      %p89 = scmp.eq.s32.totalorder %s23, 0
      %p90 = por %p88, %p89
      %p91 = scmp.ne.s32.totalorder %s79, %s80
      %p92 = scmp.eq.s32.totalorder %s24, 7
      %p93 = por %p91, %p92
      %p95 = scmp.ne.s32.totalorder %s80, %s94
      %p96 = scmp.eq.s32.totalorder %s24, 0
      %p97 = por %p95, %p96
      %s99 = sadd.s32 %s98, 1
      %p102 = scmp.eq.s32.totalorder %s18, 7
      %p103 = scmp.ne.s32.totalorder %s98, %s100
      %p104 = scmp.eq.s32.totalorder %s18, 0
      %p105 = por %p103, %p104
      %p106 = scmp.ne.s32.totalorder %s98, %s100
      %p107 = scmp.eq.s32.totalorder %s23, 7
      %p108 = por %p106, %p107
      %p109 = scmp.ne.s32.totalorder %s100, %s101
      %p110 = scmp.eq.s32.totalorder %s23, 0
      %p111 = por %p109, %p110
      %p112 = scmp.ne.s32.totalorder %s100, %s101
      %p113 = scmp.eq.s32.totalorder %s24, 7
      %p114 = por %p112, %p113
      %p116 = scmp.ne.s32.totalorder %s101, %s115
      %p117 = scmp.eq.s32.totalorder %s24, 0
      %p118 = por %p116, %p117
      %s119 = smul.u32 %s26, 2
      %s120 = sadd.s32 %s119, %s27
      %s121 = smul.u32 %s40, 2
      %s122 = sadd.s32 %s121, %s36
      %s123 = ssub.s32 %s25, %s44
      %s124 = ssub.s32 %s120, %s122
      %s125 = sor.u32 %s123, %s124
      %p126 = scmp.eq.s32.totalorder %s125, 0
      %s128 = sadd.s32 %s127, 1
      %s129 = scalar_select %p126, %s127, %s128
      %p132 = pneg %p126
      %p133 = scmp.eq.s32.totalorder %s18, 7
      %p134 = por %p132, %p133
      %p135 = scmp.ne.s32.totalorder %s127, %s130
      %p136 = scmp.eq.s32.totalorder %s18, 0
      %p137 = por %p135, %p136
      %p138 = scmp.ne.s32.totalorder %s127, %s130
      %p139 = scmp.eq.s32.totalorder %s23, 7
      %p140 = por %p138, %p139
      %p141 = scmp.ne.s32.totalorder %s130, %s131
      %p142 = scmp.eq.s32.totalorder %s23, 0
      %p143 = por %p141, %p142
      %p144 = scmp.ne.s32.totalorder %s130, %s131
      %p145 = scmp.eq.s32.totalorder %s24, 7
      %p146 = por %p144, %p145
      %p148 = scmp.ne.s32.totalorder %s131, %s147
      %p149 = scmp.eq.s32.totalorder %s24, 0
      %p150 = por %p148, %p149
      %s151 = smul.u32 %s25, 2
      %s152 = sadd.s32 %s151, %s26
      %s153 = smul.u32 %s44, 2
      %s154 = sadd.s32 %s153, %s40
      %s155 = ssub.s32 %s152, %s154
      %p156 = scmp.eq.s32.totalorder %s155, 0
      %s158 = sadd.s32 %s157, 1
      %s159 = scalar_select %p156, %s157, %s158
      %p162 = pneg %p156
      %p163 = scmp.eq.s32.totalorder %s18, 7
      %p164 = por %p162, %p163
      %p165 = scmp.ne.s32.totalorder %s157, %s160
      %p166 = scmp.eq.s32.totalorder %s18, 0
      %p167 = por %p165, %p166
      %p168 = scmp.ne.s32.totalorder %s157, %s160
      %p169 = scmp.eq.s32.totalorder %s23, 7
      %p170 = por %p168, %p169
      %p171 = scmp.ne.s32.totalorder %s160, %s161
      %p172 = scmp.eq.s32.totalorder %s23, 0
      %p173 = por %p171, %p172
      %p174 = scmp.ne.s32.totalorder %s160, %s161
      %p175 = scmp.eq.s32.totalorder %s24, 7
      %p176 = por %p174, %p175
      %p178 = scmp.ne.s32.totalorder %s161, %s177
      %p179 = scmp.eq.s32.totalorder %s24, 0
      %p180 = por %p178, %p179
      %s181 = smul.u32 %s25, 2
      %s182 = sadd.s32 %s181, %s26
      %s183 = smul.u32 %s44, 2
      %s184 = sadd.s32 %s183, %s40
      %s185 = ssub.s32 %s182, %s184
      %p186 = scmp.eq.s32.totalorder %s185, 0
      %s188 = sadd.s32 %s187, 1
      %s189 = scalar_select %p186, %s187, %s188
      %p192 = pneg %p186
      %p193 = scmp.eq.s32.totalorder %s18, 7
      %p194 = por %p192, %p193
      %p195 = scmp.ne.s32.totalorder %s187, %s190
      %p196 = scmp.eq.s32.totalorder %s18, 0
      %p197 = por %p195, %p196
      %p198 = scmp.ne.s32.totalorder %s187, %s190
      %p199 = scmp.eq.s32.totalorder %s23, 7
      %p200 = por %p198, %p199
      %p201 = scmp.ne.s32.totalorder %s190, %s191
      %p202 = scmp.eq.s32.totalorder %s23, 0
      %p203 = por %p201, %p202
      %p204 = scmp.ne.s32.totalorder %s190, %s191
      %p205 = scmp.eq.s32.totalorder %s24, 7
      %p206 = por %p204, %p205
      %p208 = scmp.ne.s32.totalorder %s191, %s207
      %p209 = scmp.eq.s32.totalorder %s24, 0
      %p210 = por %p208, %p209
      %p211 = scmp.le.s32.totalorder 1, %s18
      %p212 = scmp.lt.s32.totalorder %s18, 9
      %p213 = pnand %p211, %p212
      %p214 = pneg %p213
      // Predicated region
      $region9: #{tpu_custom_call.1} parent=5 // pred_check
        _
      $region10: #{tpu_custom_call.1} parent=5 // pred_check_branch
        %216 = sbr.rel (%p213) target = $region12
      $region11: #{tpu_custom_call.1} parent=5 // pred_region
        %s217 = ssub.s32 %s18, 1
        // Predicated region
        $region13: #{tpu_custom_call.1} parent=11 // pred_check
          %p218 = pneg %p90
        $region14: #{tpu_custom_call.1} parent=11 // pred_check_branch
          %220 = sbr.rel (%p218) target = $region16
        $region15: #{tpu_custom_call.1} parent=11 // pred_region
          _
        $region16: #{tpu_custom_call.1} parent=11 // pred_fallthru
          _
        // Predicated region
        $region17: #{tpu_custom_call.1} parent=11 // pred_check
          %p221 = pneg %p111
        $region18: #{tpu_custom_call.1} parent=11 // pred_check_branch
          %223 = sbr.rel (%p221) target = $region20
        $region19: #{tpu_custom_call.1} parent=11 // pred_region
          _
        $region20: #{tpu_custom_call.1} parent=11 // pred_fallthru
          _
      $region12: #{tpu_custom_call.1} parent=5 // pred_fallthru
        _
      %p224 = scmp.lt.s32.totalorder %s18, 8
      // Predicated region
      $region21: #{tpu_custom_call.1} parent=5 // pred_check
        %p225 = pneg %p224
      $region22: #{tpu_custom_call.1} parent=5 // pred_check_branch
        %227 = sbr.rel (%p225) target = $region24
      $region23: #{tpu_custom_call.1} parent=5 // pred_region
        // Predicated region
        $region25: #{tpu_custom_call.1} parent=23 // pred_check
          %p228 = pneg %p63
        $region26: #{tpu_custom_call.1} parent=23 // pred_check_branch
          %230 = sbr.rel (%p228) target = $region28
        $region27: #{tpu_custom_call.1} parent=23 // pred_region
          %s231 = smul.u32 %s26, 2
          %s232 = sadd.s32 %s231, %s27
          %s233 = smul.u32 8, %s232
          %p234 = scmp.lt.s32.totalorder %s25, 1
          %s235 = scalar_select %p234, %s25, 1
          %p236 = scmp.lt.s32.totalorder %s233, 31
          %s237 = scalar_select %p236, %s233, 31
          %s238 = smul.addr %s235, 32
          %s239 = sadd.s32 %s237, %s238
          %s240 = smul.addr %s239, 4
          %s241 = scalar_lea.vmem %s0, %s240
          %s242 = smul.u32 %s26, 2
          %s243 = sadd.s32 %s242, %s27
          %s244 = smul.u32 8, %s243
        $region28: #{tpu_custom_call.1} parent=23 // pred_fallthru
          _
      $region24: #{tpu_custom_call.1} parent=5 // pred_fallthru
        _
      %p245 = scmp.le.s32.totalorder 1, %s18
      %p246 = scmp.lt.s32.totalorder %s18, 9
      %p247 = pnand %p245, %p246
      %p248 = pneg %p247
      // Predicated region
      $region29: #{tpu_custom_call.1} parent=5 // pred_check
        _
      $region30: #{tpu_custom_call.1} parent=5 // pred_check_branch
        %250 = sbr.rel (%p247) target = $region32
      $region31: #{tpu_custom_call.1} parent=5 // pred_region
        %s251 = ssub.s32 %s18, 1
        %s252 = smul.u32 %s29, 2
        %s253 = sadd.s32 %s252, %s30
        %s254 = smul.u32 8, %s253
        %p255 = scmp.lt.s32.totalorder %s28, 1
        %s256 = scalar_select %p255, %s28, 1
        %p257 = scmp.lt.s32.totalorder %s254, 31
        %s258 = scalar_select %p257, %s254, 31
        %s259 = smul.addr %s256, 32
        %s260 = sadd.s32 %s258, %s259
        %s261 = smul.addr %s260, 4
        %s262 = scalar_lea.vmem %s0, %s261
        %p263 = pneg %p69
        %p264 = pneg %p66
        %p265 = pneg %p90
        %p266 = pneg %p87
        %p267 = pneg %p111
        %p268 = pneg %p108
        %p269 = pneg %p143
        %p270 = pneg %p140
        %s271 = smul.u32 %s29, 2
        %s272 = sadd.s32 %s271, %s30
        %s273 = smul.u32 8, %s272
        %p274 = scmp.lt.s32.totalorder %s28, 1
        %s275 = scalar_select %p274, %s28, 1
        %p276 = scmp.lt.s32.totalorder %s273, 31
        %s277 = scalar_select %p276, %s273, 31
        %s278 = smul.addr %s275, 32
        %s279 = sadd.s32 %s277, %s278
        %s280 = smul.addr %s279, 4
        %s281 = scalar_lea.vmem %s3, %s280
        %p282 = pneg %p173
        %p283 = pneg %p170
        %s284 = sand.u32 %s160, 1
        %s285 = scalar_lea.sflag [#allocation5], %s284
        %s286 = sand.u32 %s160, 1
        %s287 = scalar_lea.vmem [#allocation4], %s286
        %p288 = pneg %p203
        %p289 = pneg %p200
        %s290 = sand.u32 %s190, 1
        %s291 = scalar_lea.sflag [#allocation7], %s290
        %s292 = sand.u32 %s190, 1
        %s293 = scalar_lea.vmem [#allocation6], %s292
        %s294 = smul.u32 %s29, 2
        %s295 = sadd.s32 %s294, %s30
        %s296 = smul.u32 8, %s295
        %p297 = scmp.lt.s32.totalorder %s28, 1
        %s298 = scalar_select %p297, %s28, 1
        %p299 = scmp.lt.s32.totalorder %s296, 31
        %s300 = scalar_select %p299, %s296, 31
        %s301 = smul.addr %s298, 32
        %s302 = sadd.s32 %s300, %s301
        %s303 = smul.addr %s302, 4
        %s304 = scalar_lea.vmem %s0, %s303
        %s305 = smul.u32 %s29, 2
        %s306 = sadd.s32 %s305, %s30
        %s307 = smul.u32 8, %s306
        %s308 = smul.u32 %s29, 2
        %s309 = sadd.s32 %s308, %s30
        %s310 = smul.u32 8, %s309
        %p311 = scmp.lt.s32.totalorder %s28, 1
        %s312 = scalar_select %p311, %s28, 1
        %p313 = scmp.lt.s32.totalorder %s310, 31
        %s314 = scalar_select %p313, %s310, 31
        %s315 = smul.addr %s312, 32
        %s316 = sadd.s32 %s314, %s315
        %s317 = smul.addr %s316, 4
        %s318 = scalar_lea.vmem %s3, %s317
        %s319 = smul.u32 %s29, 2
        %s320 = sadd.s32 %s319, %s30
        %s321 = smul.u32 8, %s320
        %s322 = smul.u32 %s28, 2
        %s323 = sadd.s32 %s322, %s29
        %s324 = smul.u32 %s28, 2
        %s325 = sadd.s32 %s324, %s29
        %v327 = vld [vmem:[%s304] sm:$0xf]
        %v328 = vld [vmem:[%s304 + $0x4] sm:$0xf]
        %v329 = vld [vmem:[%s304 + $0x8] sm:$0xf]
        %v330 = vld [vmem:[%s304 + $0xc] sm:$0xf]
        %v331 = vld [vmem:[%s304 + $0x10] sm:$0xf]
        %v332 = vld [vmem:[%s304 + $0x14] sm:$0xf]
        %v333 = vld [vmem:[%s304 + $0x18] sm:$0xf]
        %v334 = vld [vmem:[%s304 + $0x1c] sm:$0xf]
        %v335 = vld [vmem:[%s1] sm:$0xf]
        %v336 = vld [vmem:[%s2] sm:$0x1]
        %v338 = vlaneseq
        %v339 = vshrl.u32 %v338, 7
        %v340 = vsub.s32 0, %v339
        %v341 = vrot.slane %v336, %v340
        %v351 = vunpack.c.l.b16 %v327
        %v352 = vunpack.c.l.b16 %v328
        %v353 = vunpack.c.l.b16 %v329
        %v354 = vunpack.c.l.b16 %v330
        %v355 = vunpack.c.l.b16 %v331
        %v356 = vunpack.c.l.b16 %v332
        %v357 = vunpack.c.l.b16 %v333
        %v358 = vunpack.c.l.b16 %v334
        %v359 = vpack.c.b16 %v352, %v351
        %v360 = vpack.c.b16 %v354, %v353
        %v361 = vpack.c.b16 %v356, %v355
        %v362 = vpack.c.b16 %v358, %v357
        %vm363 = vcmask 64512
        %v365 = vsel %vm363, %v359, 0
        %v368 = vsel %vm363, %v360, 0
        %v371 = vsel %vm363, %v361, 0
        %v374 = vsel %vm363, %v362, 0
        %vm376 = vcmask 1043456
        %v378 = vsel %vm376, %v335, 0
        %380 = vmatprep.subr.bf16.mxu0 0
        %381 = vmatpush1.bf16.msra.mxu0 0
        %382 = vmatprep.subr.bf16.mxu0 0
        %383 = vmatpush1.bf16.msra.mxu0 0
        %384 = vmatprep.subr.bf16.mxu0 0
        %385 = vmatpush1.bf16.msra.mxu0 0
        %386 = vmatprep.subr.bf16.mxu0 0
        %387 = vmatpush1.bf16.msra.mxu0 0
        %388 = vmatprep.subr.bf16.mxu0 0
        %389 = vmatpush1.bf16.msra.mxu0 0
        %390 = vmatprep.subr.bf16.mxu0 0
        %391 = vmatpush1.bf16.msra.mxu0 0
        %392 = vmatprep.subr.bf16.mxu0 0
        %393 = vmatpush1.bf16.msra.mxu0 0
        %394 = vmatprep.subr.bf16.mxu0 0
        %395 = vmatpush1.bf16.msra.mxu0 %v378
        %396 = vmatprep.subr.bf16.mxu0 0
        %397 = vmatpush2.bf16.msra.mxu0 0
        %398 = vmatprep.subr.bf16.mxu0 0
        %399 = vmatpush2.bf16.msra.mxu0 0
        %400 = vmatprep.subr.bf16.mxu0 0
        %401 = vmatpush2.bf16.msra.mxu0 0
        %402 = vmatprep.subr.bf16.mxu0 0
        %403 = vmatpush2.bf16.msra.mxu0 0
        %404 = vmatprep.subr.bf16.mxu0 0
        %405 = vmatpush2.bf16.msra.mxu0 0
        %406 = vmatprep.subr.bf16.mxu0 0
        %407 = vmatpush2.bf16.msra.mxu0 0
        %408 = vmatprep.subr.bf16.mxu0 0
        %409 = vmatpush2.bf16.msra.mxu0 0
        %410 = vmatprep.subr.bf16.mxu0 0
        %411 = vmatpush2.bf16.msra.mxu0 0
        %412 = vmatprep.mubr.bf16.mxu0 0
        %413 = vmatmul.mubr.bf16.gmra.mxu0 %v365
        %v414 = vpop.f32.mrf.mxu0
        %v415 = vadd.f32 %v341, %v414
        %v416 = vpop.f32.mrf.mxu0
        %v417 = vpop.f32.mrf.mxu0
        %v418 = vadd.f32 %v341, %v417
        %v419 = vpop.f32.mrf.mxu0
        %420 = vmatprep.mubr.bf16.mxu0 0
        %421 = vmatmul.mubr.bf16.gmra.mxu0 %v368
        %v422 = vpop.f32.mrf.mxu0
        %v423 = vadd.f32 %v341, %v422
        %v424 = vpop.f32.mrf.mxu0
        %v425 = vpop.f32.mrf.mxu0
        %v426 = vadd.f32 %v341, %v425
        %v427 = vpop.f32.mrf.mxu0
        %428 = vmatprep.mubr.bf16.mxu0 0
        %429 = vmatmul.mubr.bf16.gmra.mxu0 %v371
        %v430 = vpop.f32.mrf.mxu0
        %v431 = vadd.f32 %v341, %v430
        %v432 = vpop.f32.mrf.mxu0
        %v433 = vpop.f32.mrf.mxu0
        %v434 = vadd.f32 %v341, %v433
        %v435 = vpop.f32.mrf.mxu0
        %436 = vmatprep.mubr.bf16.mxu0 0
        %437 = vmatmul.mubr.bf16.gmra.mxu0 %v374
        %v438 = vpop.f32.mrf.mxu0
        %v439 = vadd.f32 %v341, %v438
        %v440 = vpop.f32.mrf.mxu0
        %v441 = vpop.f32.mrf.mxu0
        %v442 = vadd.f32 %v341, %v441
        %v443 = vpop.f32.mrf.mxu0
        %444 = vdwg.mxu0
        %v445 = vpack.c.bf16 %v418, %v415
        %v446 = vpack.c.bf16 %v426, %v423
        %v447 = vpack.c.bf16 %v434, %v431
        %v448 = vpack.c.bf16 %v442, %v439
        %v453 = vunpack.c.l.b16 %v445
        %v454 = vunpack.c.h.b16 %v445
        %v455 = vunpack.c.l.b16 %v446
        %v456 = vunpack.c.h.b16 %v446
        %v457 = vunpack.c.l.b16 %v447
        %v458 = vunpack.c.h.b16 %v447
        %v459 = vunpack.c.l.b16 %v448
        %v460 = vunpack.c.h.b16 %v448
        %v461 = vpack.c.b16 %v453, %v453
        %v462 = vpack.c.b16 %v454, %v454
        %v463 = vpack.c.b16 %v455, %v455
        %v464 = vpack.c.b16 %v456, %v456
        %v465 = vpack.c.b16 %v457, %v457
        %v466 = vpack.c.b16 %v458, %v458
        %v467 = vpack.c.b16 %v459, %v459
        %v468 = vpack.c.b16 %v460, %v460
        %vm477 = vcmask 257024
        %478 = vst.msk [vmem:[%s318] sm:$0xf] %vm477, %v461
        %479 = vst.msk [vmem:[%s318 + $0x4] sm:$0xf] %vm477, %v462
        %480 = vst.msk [vmem:[%s318 + $0x8] sm:$0xf] %vm477, %v463
        %481 = vst.msk [vmem:[%s318 + $0xc] sm:$0xf] %vm477, %v464
        %482 = vst.msk [vmem:[%s318 + $0x10] sm:$0xf] %vm477, %v465
        %483 = vst.msk [vmem:[%s318 + $0x14] sm:$0xf] %vm477, %v466
        %484 = vst.msk [vmem:[%s318 + $0x18] sm:$0xf] %vm477, %v467
        %485 = vst.msk [vmem:[%s318 + $0x1c] sm:$0xf] %vm477, %v468
        %p486 = scmp.eq.s32.totalorder %s30, 0
        // Predicated region
        $region33: #{tpu_custom_call.1} parent=31 // pred_check
          %p487 = pneg %p486
        $region34: #{tpu_custom_call.1} parent=31 // pred_check_branch
          %489 = sbr.rel (%p487) target = $region36
        $region35: #{tpu_custom_call.1} parent=31 // pred_region
          %vm490 = vcmask 253952
          %491 = vst.msk [vmem:[#allocation2] sm:$0x1] %vm490, 0.0
          %492 = vst.msk [vmem:[#allocation3] sm:$0x1] %vm490, 0.0
        $region36: #{tpu_custom_call.1} parent=31 // pred_fallthru
          _
        %v493 = vld [vmem:[#allocation2] sm:$0x1]
        %vm494 = vcmask 261120
        %v495 = vsel %vm494, %v415, 0.0
        %v496 = vsel %vm494, %v418, 0.0
        %v497 = vadd.f32 %v495, %v496
        %v498 = vsel %vm494, %v423, 0.0
        %v499 = vadd.f32 %v497, %v498
        %v500 = vsel %vm494, %v426, 0.0
        %v501 = vadd.f32 %v499, %v500
        %v502 = vsel %vm494, %v431, 0.0
        %v503 = vadd.f32 %v501, %v502
        %v504 = vsel %vm494, %v434, 0.0
        %v505 = vadd.f32 %v503, %v504
        %v506 = vsel %vm494, %v439, 0.0
        %v507 = vadd.f32 %v505, %v506
        %v508 = vsel %vm494, %v442, 0.0
        %v509 = vadd.f32 %v507, %v508
        %v510 = vrot.slane %v509, 4
        %v511 = vadd.f32 %v509, %v510
        %v512 = vrot.slane %v511, 2
        %v513 = vadd.f32 %v511, %v512
        %v514 = vrot.slane %v513, 1
        %v515 = vadd.f32 %v513, %v514
        %v516 = vadd.f32 %v493, %v515
        %vm517 = vcmask 253952
        %518 = vst.msk [vmem:[#allocation2] sm:$0x1] %vm517, %v516
        %v519 = vld [vmem:[#allocation3] sm:$0x1]
        %v520 = vmul.f32 %v415, %v415
        %v521 = vmul.f32 %v418, %v418
        %v522 = vmul.f32 %v423, %v423
        %v523 = vmul.f32 %v426, %v426
        %v524 = vmul.f32 %v431, %v431
        %v525 = vmul.f32 %v434, %v434
        %v526 = vmul.f32 %v439, %v439
        %v527 = vmul.f32 %v442, %v442
        %v528 = vsel %vm494, %v520, 0.0
        %v529 = vsel %vm494, %v521, 0.0
        %v530 = vadd.f32 %v528, %v529
        %v531 = vsel %vm494, %v522, 0.0
        %v532 = vadd.f32 %v530, %v531
        %v533 = vsel %vm494, %v523, 0.0
        %v534 = vadd.f32 %v532, %v533
        %v535 = vsel %vm494, %v524, 0.0
        %v536 = vadd.f32 %v534, %v535
        %v537 = vsel %vm494, %v525, 0.0
        %v538 = vadd.f32 %v536, %v537
        %v539 = vsel %vm494, %v526, 0.0
        %v540 = vadd.f32 %v538, %v539
        %v541 = vsel %vm494, %v527, 0.0
        %v542 = vadd.f32 %v540, %v541
        %v543 = vrot.slane %v542, 4
        %v544 = vadd.f32 %v542, %v543
        %v545 = vrot.slane %v544, 2
        %v546 = vadd.f32 %v544, %v545
        %v547 = vrot.slane %v546, 1
        %v548 = vadd.f32 %v546, %v547
        %v549 = vadd.f32 %v519, %v548
        %550 = vst.msk [vmem:[#allocation3] sm:$0x1] %vm517, %v549
        %p551 = scmp.eq.s32.totalorder %s30, 1
        // Predicated region
        $region37: #{tpu_custom_call.1} parent=31 // pred_check
          %p552 = pneg %p551
        $region38: #{tpu_custom_call.1} parent=31 // pred_check_branch
          %554 = sbr.rel (%p552) target = $region40
        $region39: #{tpu_custom_call.1} parent=31 // pred_region
          %v555 = vld [vmem:[#allocation2] sm:$0x1]
          %556 = vst.msk [vmem:[%s287] sm:$0x1] %vm517, %v555
          %v557 = vld [vmem:[#allocation3] sm:$0x1]
          %558 = vst.msk [vmem:[%s293] sm:$0x1] %vm517, %v557
        $region40: #{tpu_custom_call.1} parent=31 // pred_fallthru
          _
        %s559 = smul.u32 %s29, 2
        %s560 = sadd.s32 %s559, %s30
        %s561 = smul.u32 8, %s560
        %p562 = scmp.lt.s32.totalorder %s28, 1
        %s563 = scalar_select %p562, %s28, 1
        %p564 = scmp.lt.s32.totalorder %s561, 31
        %s565 = scalar_select %p564, %s561, 31
        %s566 = smul.addr %s563, 32
        %s567 = sadd.s32 %s565, %s566
        %s568 = smul.addr %s567, 4
        %s569 = scalar_lea.vmem %s3, %s568
        %s570 = sand.u32 %s160, 1
        %s571 = scalar_lea.sflag [#allocation5], %s570
        %s572 = sand.u32 %s160, 1
        %s573 = scalar_lea.vmem [#allocation4], %s572
        %s574 = sand.u32 %s190, 1
        %s575 = scalar_lea.sflag [#allocation7], %s574
        %s576 = sand.u32 %s190, 1
        %s577 = scalar_lea.vmem [#allocation6], %s576
        // Predicated region
        $region41: #{tpu_custom_call.1} parent=31 // pred_check
          %p578 = pneg %p140
        $region42: #{tpu_custom_call.1} parent=31 // pred_check_branch
          %580 = sbr.rel (%p578) target = $region44
        $region43: #{tpu_custom_call.1} parent=31 // pred_region
          %s581 = smul.u32 %s29, 2
          %s582 = sadd.s32 %s581, %s30
          %s583 = smul.u32 8, %s582
        $region44: #{tpu_custom_call.1} parent=31 // pred_fallthru
          _
        // Predicated region
        $region45: #{tpu_custom_call.1} parent=31 // pred_check
          %p584 = pneg %p170
        $region46: #{tpu_custom_call.1} parent=31 // pred_check_branch
          %586 = sbr.rel (%p584) target = $region48
        $region47: #{tpu_custom_call.1} parent=31 // pred_region
          %s587 = smul.u32 %s28, 2
          %s588 = sadd.s32 %s587, %s29
          %s590 = ssub.s32 16, 16
          %591 = vsyncadd %s571, %s590
          %s592 = smul.addr %s588, 16
          %s593 = scalar_lea.hbm %s4, %s592
          %s595 = sshll.u32 %s573, 4
          %s596 = int_to_ptr.vmem [resolvable:$true] %s595
          %598 = dma.vmem_to_hbm [thread:$0]  %s596, 16, %s593, %s571
        $region48: #{tpu_custom_call.1} parent=31 // pred_fallthru
          _
        // Predicated region
        $region49: #{tpu_custom_call.1} parent=31 // pred_check
          %p599 = pneg %p200
        $region50: #{tpu_custom_call.1} parent=31 // pred_check_branch
          %601 = sbr.rel (%p599) target = $region52
        $region51: #{tpu_custom_call.1} parent=31 // pred_region
          %s602 = smul.u32 %s28, 2
          %s603 = sadd.s32 %s602, %s29
          %s605 = ssub.s32 16, 16
          %606 = vsyncadd %s575, %s605
          %s607 = smul.addr %s603, 16
          %s608 = scalar_lea.hbm %s5, %s607
          %s610 = sshll.u32 %s577, 4
          %s611 = int_to_ptr.vmem [resolvable:$true] %s610
          %613 = dma.vmem_to_hbm [thread:$0]  %s611, 16, %s608, %s575
        $region52: #{tpu_custom_call.1} parent=31 // pred_fallthru
          _
      $region32: #{tpu_custom_call.1} parent=5 // pred_fallthru
        _
      %p614 = scmp.le.s32.totalorder 2, %s18
      // Predicated region
      $region53: #{tpu_custom_call.1} parent=5 // pred_check
        %p615 = pneg %p614
      $region54: #{tpu_custom_call.1} parent=5 // pred_check_branch
        %617 = sbr.rel (%p615) target = $region56
      $region55: #{tpu_custom_call.1} parent=5 // pred_region
        %s618 = ssub.s32 %s18, 2
        // Predicated region
        $region57: #{tpu_custom_call.1} parent=55 // pred_check
          %p619 = pneg %p146
        $region58: #{tpu_custom_call.1} parent=55 // pred_check_branch
          %621 = sbr.rel (%p619) target = $region60
        $region59: #{tpu_custom_call.1} parent=55 // pred_region
          %s622 = smul.u32 %s32, 2
          %s623 = sadd.s32 %s622, %s33
          %s624 = smul.u32 8, %s623
          %p625 = scmp.lt.s32.totalorder %s31, 1
          %s626 = scalar_select %p625, %s31, 1
          %p627 = scmp.lt.s32.totalorder %s624, 31
          %s628 = scalar_select %p627, %s624, 31
          %s629 = smul.addr %s626, 32
          %s630 = sadd.s32 %s628, %s629
          %s631 = smul.addr %s630, 4
          %s632 = scalar_lea.vmem %s3, %s631
        $region60: #{tpu_custom_call.1} parent=55 // pred_fallthru
          _
        // Predicated region
        $region61: #{tpu_custom_call.1} parent=55 // pred_check
          %p633 = pneg %p176
        $region62: #{tpu_custom_call.1} parent=55 // pred_check_branch
          %635 = sbr.rel (%p633) target = $region64
        $region63: #{tpu_custom_call.1} parent=55 // pred_region
          %s636 = sand.u32 %s161, 1
          %s637 = scalar_lea.sflag [#allocation5], %s636
          %s638 = sand.u32 %s161, 1
          %s639 = scalar_lea.vmem [#allocation4], %s638
          %640 = dma.done %s637, 16
        $region64: #{tpu_custom_call.1} parent=55 // pred_fallthru
          _
        // Predicated region
        $region65: #{tpu_custom_call.1} parent=55 // pred_check
          %p641 = pneg %p206
        $region66: #{tpu_custom_call.1} parent=55 // pred_check_branch
          %643 = sbr.rel (%p641) target = $region68
        $region67: #{tpu_custom_call.1} parent=55 // pred_region
          %s644 = sand.u32 %s191, 1
          %s645 = scalar_lea.sflag [#allocation7], %s644
          %s646 = sand.u32 %s191, 1
          %s647 = scalar_lea.vmem [#allocation6], %s646
          %648 = dma.done %s645, 16
        $region68: #{tpu_custom_call.1} parent=55 // pred_fallthru
          _
      $region56: #{tpu_custom_call.1} parent=5 // pred_fallthru
        _
    $region6: #{tpu_custom_call.1} parent=1 // loop_footer
      %s22 = sadd.s32 1, %s18
    $region7: #{tpu_custom_call.1} parent=1 // loop_footer_branch
      %17 = sbr.rel target = $region3
    $region8: #{tpu_custom_call.1} parent=1 // loop_exit
      _
    %649 = vsyncpa [#allocation5], 1
    %s650 = scalar_lea.sflag [#allocation5], 1
    %651 = vsyncpa %s650, 1
    %652 = vsyncpa [#allocation7], 1
    %s653 = scalar_lea.sflag [#allocation7], 1
    %654 = vsyncpa %s653, 1

</llo_original>
